<compile_context>
chip_gen: v7x
topology: tpu7x:2x2x1
jax: 0.10.0
libtpu: 0.0.40
codegen_flags: <defaults>
</compile_context>

<pallas_src>
import functools

import jax
import jax.numpy as jnp
from jax.experimental import pallas as pl
from jax.experimental.pallas import tpu as pltpu


# ----------------------------------------------------------------------------
# Kernel
# ----------------------------------------------------------------------------
def _lstm_kernel(gx_ref, m_ref, whh_ref, h0_ref, c0_ref, out_ref, h_st, c_st,
                 *, k, backward, pack_gates):
    """One time-block of the recurrence.

    gx_ref : (t_blk, b_blk, 4H)  precomputed x@W_ih^T + b  (time-major)
    m_ref  : (t_blk, b_blk, H)   mask broadcast over H lanes (time-major)
    whh_ref: (H, 4H)             W_hh^T, resident
    out_ref: (t_blk//k, b_blk, k*H) lane-packed, time-major hidden states
    h_st/c_st: (b_blk, H) f32 carried state scratch
    """
    H = h_st.shape[-1]
    t_blk = gx_ref.shape[0]
    n_groups = t_blk // k

    # Initialize carried state from (h0, c0) on the first time block of this
    # batch shard (processing-order first; for backward that is the last block).
    @pl.when(pl.program_id(1) == 0)
    def _():
        h_st[...] = jnp.broadcast_to(h0_ref[...], h_st.shape)
        c_st[...] = jnp.broadcast_to(c0_ref[...], c_st.shape)

    whh = whh_ref[...]                       # (H, 4H) resident for the block
    f32_whh = whh.dtype == jnp.float32

    def cell(h, c, gx_s, m_s):
        hd = h if f32_whh else h.astype(whh.dtype)
        gates = gx_s.astype(jnp.float32) + jnp.dot(
            hd, whh, preferred_element_type=jnp.float32)          # (b_blk, 4H)
        if pack_gates:
            # one EUP pass over the packed 4H lanes; lane-slicing afterwards
            # is XLU relayout work off the EUP/MXU critical path.
            sig = jax.nn.sigmoid(gates)
            i_g = sig[:, 0 * H:1 * H]
            f_g = sig[:, 1 * H:2 * H]
            o_g = sig[:, 3 * H:4 * H]
        else:
            i_g = jax.nn.sigmoid(gates[:, 0 * H:1 * H])
            f_g = jax.nn.sigmoid(gates[:, 1 * H:2 * H])
            o_g = jax.nn.sigmoid(gates[:, 3 * H:4 * H])
        g_g = jnp.tanh(gates[:, 2 * H:3 * H])
        c_new = f_g * c + i_g * g_g
        h_new = o_g * jnp.tanh(c_new)
        # Exact float blend -> matches the module for any (even fractional) mask.
        h = h + m_s * (h_new - h)
        c = c + m_s * (c_new - c)
        return h, c

    def group_body(g, carry):
        h, c = carry
        gidx = (n_groups - 1 - g) if backward else g
        s0 = pl.multiple_of(gidx * k, k)
        hs = [None] * k
        for j in (range(k - 1, -1, -1) if backward else range(k)):
            # time-major: single aligned (b_blk, 4H) / (b_blk, H) tile loads
            h, c = cell(h, c, gx_ref[s0 + j], m_ref[s0 + j])
            hs[j] = h
        # lane-dense, time-major store: one unmasked (b_blk, k*H) tile
        out_ref[gidx] = jnp.concatenate(hs, axis=-1) if k > 1 else hs[0]
        return h, c

    h, c = jax.lax.fori_loop(0, n_groups, group_body,
                             (h_st[...], c_st[...]))
    h_st[...] = h
    c_st[...] = c


# ----------------------------------------------------------------------------
# Wrapper
# ----------------------------------------------------------------------------
def _round_up(v, m):
    return -(-v // m) * m


def _vmem_block_bytes(t_blk, b_blk, H, stream_itemsize):
    """Estimate of pipelined VMEM use for the chosen block sizes."""
    G4 = 4 * H
    gates = t_blk * b_blk * G4 * stream_itemsize
    maskb = t_blk * b_blk * H * 4
    outb = t_blk * b_blk * H * 4
    whh = H * G4 * stream_itemsize
    small = 2 * H * 4
    scratch = 2 * b_blk * H * 4
    return 2 * (gates + maskb + outb) + 2 * (whh + small) + scratch


def _choose_t_blk(L, b_blk, H, stream_itemsize, budget, align):
    cand = _round_up(min(max(L, align), 512), align)
    while cand > align and _vmem_block_bytes(cand, b_blk, H, stream_itemsize) > budget:
        cand = _round_up(cand // 2, align)
    return cand


def lstm_rnn_forward(x, mask, params, backward=False, t_blk=None,
                     stream_dtype=jnp.float32, num_batch_shards=1,
                     vmem_block_budget=32 * 1024 * 1024):
    """x: (B, L, I) f32, mask: (B, L) f32 -> (B, L, H) f32."""
    B, L, I = x.shape
    H = params["h0"].shape[-1]
    G4 = 4 * H

    x = x.astype(jnp.float32)
    mask = mask.astype(jnp.float32)

    # --- batch padding (sublane multiple; also divisible by batch shards) ---
    bb_align = 8 * num_batch_shards
    B_pad = max(bb_align, _round_up(B, bb_align))
    if B_pad != B:
        x = jnp.pad(x, ((0, B_pad - B), (0, 0), (0, 0)))
        mask = jnp.pad(mask, ((0, B_pad - B), (0, 0)))     # padded rows: mask=0
    b_blk = B_pad // num_batch_shards

    # --- lane-dense output packing factor ---
    k = 128 // H if (H < 128 and 128 % H == 0) else 1
    align = max(8, k)

    stream_itemsize = jnp.dtype(stream_dtype).itemsize

    # --- time blocking (sized from a VMEM budget, not a fixed 128) ---
    if t_blk is None:
        t_blk = _choose_t_blk(L, b_blk, H, stream_itemsize, vmem_block_budget, align)
    assert t_blk % align == 0, "t_blk must be a multiple of max(8, 128//H)"
    L_pad = _round_up(L, t_blk)
    if L_pad != L:   # pad time with mask=0 steps (state unchanged there)
        x = jnp.pad(x, ((0, 0), (0, L_pad - L), (0, 0)))
        mask = jnp.pad(mask, ((0, 0), (0, L_pad - L)))
    num_blocks = L_pad // t_blk
    n_grp = t_blk // k

    # --- hoisted input projection, produced TIME-MAJOR: (L_pad, B_pad, 4H) ---
    bias = (params["b_ih"] + params["b_hh"]).astype(jnp.float32)
    gates_x = (jnp.einsum("bli,gi->lbg", x, params["w_ih"].astype(jnp.float32))
               + bias).astype(stream_dtype)

    # --- time-major mask, pre-broadcast over H lanes so per-step loads are
    #     full aligned tiles (trades a small extra HBM read for no masked
    #     gathers inside the serial loop) ---
    mask_bh = jnp.broadcast_to(jnp.transpose(mask)[:, :, None],
                               (L_pad, B_pad, H)).astype(jnp.float32)

    whh_t = params["w_hh"].T.astype(stream_dtype)            # (H, 4H)
    h0 = params["h0"].astype(jnp.float32)
    c0 = params["c0"].astype(jnp.float32)

    if backward:
        tmap = lambda t: num_blocks - 1 - t
    else:
        tmap = lambda t: t

    kernel = functools.partial(_lstm_kernel, k=k, backward=backward,
                               pack_gates=(H < 128))

    needed = _vmem_block_bytes(t_blk, b_blk, H, stream_itemsize)
    # derived limit, clamped so it is also safe on v7x's 64 MiB physical VMEM
    vmem_limit = int(min(max(needed + (8 << 20), 24 << 20), 56 << 20))

    out_packed = pl.pallas_call(
        kernel,
        out_shape=jax.ShapeDtypeStruct((L_pad // k, B_pad, k * H), jnp.float32),
        grid_spec=pltpu.PrefetchScalarGridSpec(
            num_scalar_prefetch=0,
            grid=(num_batch_shards, num_blocks),
            in_specs=[
                pl.BlockSpec((t_blk, b_blk, G4), lambda b, t: (tmap(t), b, 0)),  # gates_x
                pl.BlockSpec((t_blk, b_blk, H), lambda b, t: (tmap(t), b, 0)),   # mask
                pl.BlockSpec((H, G4), lambda b, t: (0, 0)),                      # W_hh^T
                pl.BlockSpec((1, H), lambda b, t: (0, 0)),                       # h0
                pl.BlockSpec((1, H), lambda b, t: (0, 0)),                       # c0
            ],
            out_specs=pl.BlockSpec((n_grp, b_blk, k * H),
                                   lambda b, t: (tmap(t), b, 0)),
            scratch_shapes=[
                pltpu.VMEM((b_blk, H), jnp.float32),          # h carry
                pltpu.VMEM((b_blk, H), jnp.float32),          # c carry
            ],
        ),
        compiler_params=pltpu.CompilerParams(
            # batch shards are independent -> "parallel" (v7x 2nd TensorCore);
            # the time axis carries state -> "arbitrary".
            dimension_semantics=("parallel", "arbitrary"),
            vmem_limit_bytes=vmem_limit,
        ),
    )(gates_x, mask_bh, whh_t, h0, c0)

    # unpack: (L_pad//k, B_pad, k*H) -> (B_pad, L_pad, H) (one wrapper transpose)
    out = out_packed.reshape(L_pad // k, B_pad, k, H)
    out = jnp.transpose(out, (1, 0, 2, 3)).reshape(B_pad, L_pad, H)
    return out[:B, :L]


def lstm_rnn_fwd_bwd(x, mask, params, t_blk=None, stream_dtype=jnp.float32,
                     num_batch_shards=1):
    """Fused forward + backward directions in ONE kernel call.

    The time-reversed sequence is stacked on the batch axis, which fills MXU
    rows / sublanes and halves the number of serial steps versus two calls.
    Returns (out_forward, out_backward), each (B, L, H).
    """
    B = x.shape[0]
    x2 = jnp.concatenate([x, jnp.flip(x, axis=1)], axis=0)
    m2 = jnp.concatenate([mask, jnp.flip(mask, axis=1)], axis=0)
    out2 = lstm_rnn_forward(x2, m2, params, backward=False, t_blk=t_blk,
                            stream_dtype=stream_dtype,
                            num_batch_shards=num_batch_shards)
    out_f = out2[:B]
    out_b = jnp.flip(out2[B:], axis=1)
    return out_f, out_b


# ----------------------------------------------------------------------------
# Parameter init + pure-JAX reference (for the sanity check)
# ----------------------------------------------------------------------------
def init_params(key, input_dim, hidden_dim):
    """Deterministic init matching the module's reset_parameters() scheme."""
    k_ih, k_hh = jax.random.split(key)
    bound = (6.0 / (input_dim + 4 * hidden_dim)) ** 0.5        # xavier_uniform
    w_ih = jax.random.uniform(k_ih, (4 * hidden_dim, input_dim),
                              jnp.float32, -bound, bound)
    w_hh = jax.nn.initializers.orthogonal()(k_hh, (4 * hidden_dim, hidden_dim),
                                            jnp.float32)
    return {
        "w_ih": w_ih,
        "w_hh": w_hh,
        "b_ih": jnp.zeros((4 * hidden_dim,), jnp.float32),
        "b_hh": jnp.zeros((4 * hidden_dim,), jnp.float32),
        "h0": jnp.zeros((1, hidden_dim), jnp.float32),
        "c0": jnp.zeros((1, hidden_dim), jnp.float32),
    }


def _reference_forward(x, mask, params, backward=False):
    """Pure-JAX reference mirroring the PyTorch loop."""
    B, L, _ = x.shape
    H = params["h0"].shape[-1]
    prev_h = jnp.broadcast_to(params["h0"], (B, H))
    prev_c = jnp.broadcast_to(params["c0"], (B, H))
    hs = []
    order = range(L - 1, -1, -1) if backward else range(L)
    for idx in order:
        m = mask[:, idx, None]
        gates = (x[:, idx] @ params["w_ih"].T + params["b_ih"]
                 + prev_h @ params["w_hh"].T + params["b_hh"])
        i = jax.nn.sigmoid(gates[:, 0 * H:1 * H])
        f = jax.nn.sigmoid(gates[:, 1 * H:2 * H])
        g = jnp.tanh(gates[:, 2 * H:3 * H])
        o = jax.nn.sigmoid(gates[:, 3 * H:4 * H])
        c = f * prev_c + i * g
        h = o * jnp.tanh(c)
        prev_h = h * m + prev_h * (1.0 - m)
        prev_c = c * m + prev_c * (1.0 - m)
        hs.append(prev_h)
    hs = hs[::-1] if backward else hs
    return jnp.stack(hs, axis=1)


if __name__ == "__main__":
    # Small shapes, large enough to exercise multi-block carry (t_blk=32 -> 2
    # time blocks), lane-dense packing (k = 128/H = 4), the fused fwd+bwd
    # path, and the bf16-streaming knob.
    B, L, I, H = 2, 64, 4, 32
    key = jax.random.PRNGKey(0)
    k_p, k_x, k_m = jax.random.split(key, 3)

    params = init_params(k_p, I, H)
    x = jax.random.normal(k_x, (B, L, I), jnp.float32)
    mask = (jax.random.uniform(k_m, (B, L)) > 0.3).astype(jnp.float32)

    fwd = jax.jit(functools.partial(lstm_rnn_forward, backward=False, t_blk=32))
    bwd = jax.jit(functools.partial(lstm_rnn_forward, backward=True, t_blk=32))
    both = jax.jit(lstm_rnn_fwd_bwd)

    out_f = fwd(x, mask, params)
    out_b = bwd(x, mask, params)
    out_f2, out_b2 = both(x, mask, params)
    jax.block_until_ready((out_f, out_b, out_f2, out_b2))

    ref_f = _reference_forward(x, mask, params, backward=False)
    ref_b = _reference_forward(x, mask, params, backward=True)
    assert out_f.shape == (B, L, H) and out_b.shape == (B, L, H)
    assert jnp.allclose(out_f, ref_f, atol=2e-4, rtol=2e-4)
    assert jnp.allclose(out_b, ref_b, atol=2e-4, rtol=2e-4)
    assert jnp.allclose(out_f2, ref_f, atol=2e-4, rtol=2e-4)
    assert jnp.allclose(out_b2, ref_b, atol=2e-4, rtol=2e-4)

    # bf16-streamed gates_x / W_hh (halves the dominant HBM stream); h/c state
    # and accumulation stay f32, so only a loose drift check is applied.
    out_bf = jax.jit(functools.partial(lstm_rnn_forward, backward=False,
                                       stream_dtype=jnp.bfloat16))(x, mask, params)
    jax.block_until_ready(out_bf)
    assert out_bf.shape == (B, L, H)
    assert float(jnp.max(jnp.abs(out_bf - ref_f))) < 0.25

    print("KERNEL_OK")
</pallas_src>

<mosaic_0001>
module attributes {stable_mosaic.version = 11 : i64} {
  func.func @_lstm_kernel(%arg0: i32, %arg1: i32, %arg2: memref<32x8x128xf32, #tpu.memory_space<vmem>>, %arg3: memref<32x8x32xf32, #tpu.memory_space<vmem>>, %arg4: memref<32x128xf32, #tpu.memory_space<vmem>>, %arg5: memref<1x32xf32, #tpu.memory_space<vmem>>, %arg6: memref<1x32xf32, #tpu.memory_space<vmem>>, %arg7: memref<8x8x128xf32, #tpu.memory_space<vmem>>, %arg8: memref<8x32xf32, #tpu.memory_space<vmem>>, %arg9: memref<8x32xf32, #tpu.memory_space<vmem>>) attributes {dimension_semantics = [#tpu.dimension_semantics<parallel>, #tpu.dimension_semantics<arbitrary>], iteration_bounds = array<i64: 1, 2>, scalar_prefetch = 0 : i64, scratch_operands = 2 : i64, tpu.core_type = #tpu.core_type<tc>, window_params = [{transform_indices = @transform_0, window_bounds = array<i64: 32, 8, 128>}, {transform_indices = @transform_1, window_bounds = array<i64: 32, 8, 32>}, {pipeline_mode = #tpu.pipeline_mode<synchronous>, transform_indices = @transform_2, window_bounds = array<i64: 32, 128>}, {pipeline_mode = #tpu.pipeline_mode<synchronous>, transform_indices = @transform_3, window_bounds = array<i64: 1, 32>}, {pipeline_mode = #tpu.pipeline_mode<synchronous>, transform_indices = @transform_4, window_bounds = array<i64: 1, 32>}, {transform_indices = @transform_5, window_bounds = array<i64: 8, 8, 128>}]} {
    %c0_i32 = arith.constant 0 : i32
    %0 = arith.cmpi eq, %arg1, %c0_i32 : i32
    %1 = arith.extui %0 : i1 to i32
    %c0_i32_0 = arith.constant 0 : i32
    %2 = arith.cmpi ne, %1, %c0_i32_0 : i32
    scf.if %2 {
      %c0_12 = arith.constant 0 : index
      %c0_13 = arith.constant 0 : index
      %10 = vector.load %arg5[%c0_12, %c0_13] : memref<1x32xf32, #tpu.memory_space<vmem>>, vector<1x32xf32>
      %11 = vector.shape_cast %10 : vector<1x32xf32> to vector<1x32xf32>
      %12 = vector.broadcast %11 : vector<1x32xf32> to vector<8x32xf32>
      %c0_14 = arith.constant 0 : index
      %c0_15 = arith.constant 0 : index
      %13 = vector.load %arg8[%c0_14, %c0_15] : memref<8x32xf32, #tpu.memory_space<vmem>>, vector<8x32xf32>
      tpu.vector_store %arg8[%c0_14, %c0_15], %12 {strides = array<i32>} : memref<8x32xf32, #tpu.memory_space<vmem>>, vector<8x32xf32>,
      %c0_16 = arith.constant 0 : index
      %c0_17 = arith.constant 0 : index
      %14 = vector.load %arg6[%c0_16, %c0_17] : memref<1x32xf32, #tpu.memory_space<vmem>>, vector<1x32xf32>
      %15 = vector.shape_cast %14 : vector<1x32xf32> to vector<1x32xf32>
      %16 = vector.broadcast %15 : vector<1x32xf32> to vector<8x32xf32>
      %c0_18 = arith.constant 0 : index
      %c0_19 = arith.constant 0 : index
      %17 = vector.load %arg9[%c0_18, %c0_19] : memref<8x32xf32, #tpu.memory_space<vmem>>, vector<8x32xf32>
      tpu.vector_store %arg9[%c0_18, %c0_19], %16 {strides = array<i32>} : memref<8x32xf32, #tpu.memory_space<vmem>>, vector<8x32xf32>,
    } else {
    }
    %c0 = arith.constant 0 : index
    %c0_1 = arith.constant 0 : index
    %3 = vector.load %arg4[%c0, %c0_1] : memref<32x128xf32, #tpu.memory_space<vmem>>, vector<32x128xf32>
    %c0_2 = arith.constant 0 : index
    %c0_3 = arith.constant 0 : index
    %4 = vector.load %arg8[%c0_2, %c0_3] : memref<8x32xf32, #tpu.memory_space<vmem>>, vector<8x32xf32>
    %c0_4 = arith.constant 0 : index
    %c0_5 = arith.constant 0 : index
    %5 = vector.load %arg9[%c0_4, %c0_5] : memref<8x32xf32, #tpu.memory_space<vmem>>, vector<8x32xf32>
    %c0_i32_6 = arith.constant 0 : i32
    %c8_i32 = arith.constant 8 : i32
    %6 = arith.addi %c0_i32_6, %c8_i32 : i32
    %c1_i32 = arith.constant 1 : i32
    %7:2 = scf.for %arg10 = %c0_i32_6 to %6 step %c1_i32 iter_args(%arg11 = %4, %arg12 = %5) -> (vector<8x32xf32>, vector<8x32xf32>)  : i32 {
      %c4_i32 = arith.constant 4 : i32
      %10 = arith.muli %arg10, %c4_i32 : i32
      %11 = tpu.assume_multiple %10, 4 : i32
      %c0_i32_12 = arith.constant 0 : i32
      %12 = arith.addi %11, %c0_i32_12 : i32
      %13 = arith.index_cast %12 : i32 to index
      %c0_13 = arith.constant 0 : index
      %c0_14 = arith.constant 0 : index
      %14 = vector.load %arg2[%13, %c0_13, %c0_14] : memref<32x8x128xf32, #tpu.memory_space<vmem>>, vector<1x8x128xf32>
      %15 = vector.shape_cast %14 : vector<1x8x128xf32> to vector<8x128xf32>
      %c0_i32_15 = arith.constant 0 : i32
      %16 = arith.addi %11, %c0_i32_15 : i32
      %17 = arith.index_cast %16 : i32 to index
      %c0_16 = arith.constant 0 : index
      %c0_17 = arith.constant 0 : index
      %18 = vector.load %arg3[%17, %c0_16, %c0_17] : memref<32x8x32xf32, #tpu.memory_space<vmem>>, vector<1x8x32xf32>
      %19 = vector.shape_cast %18 : vector<1x8x32xf32> to vector<8x32xf32>
      %cst = arith.constant dense<0.000000e+00> : vector<8x128xf32>
      %20 = tpu.matmul %arg11, %3, %cst {dimension_numbers = #tpu.dot_dimension_numbers<[1], [0], [0], [1], [0, 0, 1, 1], [], []>} : vector<8x32xf32>, vector<32x128xf32>, vector<8x128xf32> -> vector<8x128xf32>
      %21 = arith.addf %15, %20 : vector<8x128xf32>
      %22 = arith.negf %21 : vector<8x128xf32>
      %23 = math.exp %22 : vector<8x128xf32>
      %cst_18 = arith.constant 1.000000e+00 : f32
      %24 = vector.broadcast %cst_18 : f32 to vector<8x128xf32>
      %25 = arith.addf %24, %23 : vector<8x128xf32>
      %26 = arith.divf %24, %25 : vector<8x128xf32>
      %27 = vector.extract_strided_slice %26 {offsets = [0, 0], sizes = [8, 32], strides = [1, 1]} : vector<8x128xf32> to vector<8x32xf32>
      %28 = vector.extract_strided_slice %26 {offsets = [0, 32], sizes = [8, 32], strides = [1, 1]} : vector<8x128xf32> to vector<8x32xf32>
      %29 = vector.extract_strided_slice %26 {offsets = [0, 96], sizes = [8, 32], strides = [1, 1]} : vector<8x128xf32> to vector<8x32xf32>
      %30 = vector.extract_strided_slice %21 {offsets = [0, 64], sizes = [8, 32], strides = [1, 1]} : vector<8x128xf32> to vector<8x32xf32>
      %31 = math.tanh %30 : vector<8x32xf32>
      %32 = arith.mulf %28, %arg12 : vector<8x32xf32>
      %33 = arith.mulf %27, %31 : vector<8x32xf32>
      %34 = arith.addf %32, %33 : vector<8x32xf32>
      %35 = math.tanh %34 : vector<8x32xf32>
      %36 = arith.mulf %29, %35 : vector<8x32xf32>
      %37 = arith.subf %36, %arg11 : vector<8x32xf32>
      %38 = arith.mulf %19, %37 : vector<8x32xf32>
      %39 = arith.addf %arg11, %38 : vector<8x32xf32>
      %40 = arith.subf %34, %arg12 : vector<8x32xf32>
      %41 = arith.mulf %19, %40 : vector<8x32xf32>
      %42 = arith.addf %arg12, %41 : vector<8x32xf32>
      %c1_i32_19 = arith.constant 1 : i32
      %43 = arith.addi %11, %c1_i32_19 : i32
      %44 = arith.index_cast %43 : i32 to index
      %c0_20 = arith.constant 0 : index
      %c0_21 = arith.constant 0 : index
      %45 = vector.load %arg2[%44, %c0_20, %c0_21] : memref<32x8x128xf32, #tpu.memory_space<vmem>>, vector<1x8x128xf32>
      %46 = vector.shape_cast %45 : vector<1x8x128xf32> to vector<8x128xf32>
      %c1_i32_22 = arith.constant 1 : i32
      %47 = arith.addi %11, %c1_i32_22 : i32
      %48 = arith.index_cast %47 : i32 to index
      %c0_23 = arith.constant 0 : index
      %c0_24 = arith.constant 0 : index
      %49 = vector.load %arg3[%48, %c0_23, %c0_24] : memref<32x8x32xf32, #tpu.memory_space<vmem>>, vector<1x8x32xf32>
      %50 = vector.shape_cast %49 : vector<1x8x32xf32> to vector<8x32xf32>
      %cst_25 = arith.constant dense<0.000000e+00> : vector<8x128xf32>
      %51 = tpu.matmul %39, %3, %cst_25 {dimension_numbers = #tpu.dot_dimension_numbers<[1], [0], [0], [1], [0, 0, 1, 1], [], []>} : vector<8x32xf32>, vector<32x128xf32>, vector<8x128xf32> -> vector<8x128xf32>
      %52 = arith.addf %46, %51 : vector<8x128xf32>
      %53 = arith.negf %52 : vector<8x128xf32>
      %54 = math.exp %53 : vector<8x128xf32>
      %cst_26 = arith.constant 1.000000e+00 : f32
      %55 = vector.broadcast %cst_26 : f32 to vector<8x128xf32>
      %56 = arith.addf %55, %54 : vector<8x128xf32>
      %57 = arith.divf %55, %56 : vector<8x128xf32>
      %58 = vector.extract_strided_slice %57 {offsets = [0, 0], sizes = [8, 32], strides = [1, 1]} : vector<8x128xf32> to vector<8x32xf32>
      %59 = vector.extract_strided_slice %57 {offsets = [0, 32], sizes = [8, 32], strides = [1, 1]} : vector<8x128xf32> to vector<8x32xf32>
      %60 = vector.extract_strided_slice %57 {offsets = [0, 96], sizes = [8, 32], strides = [1, 1]} : vector<8x128xf32> to vector<8x32xf32>
      %61 = vector.extract_strided_slice %52 {offsets = [0, 64], sizes = [8, 32], strides = [1, 1]} : vector<8x128xf32> to vector<8x32xf32>
      %62 = math.tanh %61 : vector<8x32xf32>
      %63 = arith.mulf %59, %42 : vector<8x32xf32>
      %64 = arith.mulf %58, %62 : vector<8x32xf32>
      %65 = arith.addf %63, %64 : vector<8x32xf32>
      %66 = math.tanh %65 : vector<8x32xf32>
      %67 = arith.mulf %60, %66 : vector<8x32xf32>
      %68 = arith.subf %67, %39 : vector<8x32xf32>
      %69 = arith.mulf %50, %68 : vector<8x32xf32>
      %70 = arith.addf %39, %69 : vector<8x32xf32>
      %71 = arith.subf %65, %42 : vector<8x32xf32>
      %72 = arith.mulf %50, %71 : vector<8x32xf32>
      %73 = arith.addf %42, %72 : vector<8x32xf32>
      %c2_i32 = arith.constant 2 : i32
      %74 = arith.addi %11, %c2_i32 : i32
      %75 = arith.index_cast %74 : i32 to index
      %c0_27 = arith.constant 0 : index
      %c0_28 = arith.constant 0 : index
      %76 = vector.load %arg2[%75, %c0_27, %c0_28] : memref<32x8x128xf32, #tpu.memory_space<vmem>>, vector<1x8x128xf32>
      %77 = vector.shape_cast %76 : vector<1x8x128xf32> to vector<8x128xf32>
      %c2_i32_29 = arith.constant 2 : i32
      %78 = arith.addi %11, %c2_i32_29 : i32
      %79 = arith.index_cast %78 : i32 to index
      %c0_30 = arith.constant 0 : index
      %c0_31 = arith.constant 0 : index
      %80 = vector.load %arg3[%79, %c0_30, %c0_31] : memref<32x8x32xf32, #tpu.memory_space<vmem>>, vector<1x8x32xf32>
      %81 = vector.shape_cast %80 : vector<1x8x32xf32> to vector<8x32xf32>
      %cst_32 = arith.constant dense<0.000000e+00> : vector<8x128xf32>
      %82 = tpu.matmul %70, %3, %cst_32 {dimension_numbers = #tpu.dot_dimension_numbers<[1], [0], [0], [1], [0, 0, 1, 1], [], []>} : vector<8x32xf32>, vector<32x128xf32>, vector<8x128xf32> -> vector<8x128xf32>
      %83 = arith.addf %77, %82 : vector<8x128xf32>
      %84 = arith.negf %83 : vector<8x128xf32>
      %85 = math.exp %84 : vector<8x128xf32>
      %cst_33 = arith.constant 1.000000e+00 : f32
      %86 = vector.broadcast %cst_33 : f32 to vector<8x128xf32>
      %87 = arith.addf %86, %85 : vector<8x128xf32>
      %88 = arith.divf %86, %87 : vector<8x128xf32>
      %89 = vector.extract_strided_slice %88 {offsets = [0, 0], sizes = [8, 32], strides = [1, 1]} : vector<8x128xf32> to vector<8x32xf32>
      %90 = vector.extract_strided_slice %88 {offsets = [0, 32], sizes = [8, 32], strides = [1, 1]} : vector<8x128xf32> to vector<8x32xf32>
      %91 = vector.extract_strided_slice %88 {offsets = [0, 96], sizes = [8, 32], strides = [1, 1]} : vector<8x128xf32> to vector<8x32xf32>
      %92 = vector.extract_strided_slice %83 {offsets = [0, 64], sizes = [8, 32], strides = [1, 1]} : vector<8x128xf32> to vector<8x32xf32>
      %93 = math.tanh %92 : vector<8x32xf32>
      %94 = arith.mulf %90, %73 : vector<8x32xf32>
      %95 = arith.mulf %89, %93 : vector<8x32xf32>
      %96 = arith.addf %94, %95 : vector<8x32xf32>
      %97 = math.tanh %96 : vector<8x32xf32>
      %98 = arith.mulf %91, %97 : vector<8x32xf32>
      %99 = arith.subf %98, %70 : vector<8x32xf32>
      %100 = arith.mulf %81, %99 : vector<8x32xf32>
      %101 = arith.addf %70, %100 : vector<8x32xf32>
      %102 = arith.subf %96, %73 : vector<8x32xf32>
      %103 = arith.mulf %81, %102 : vector<8x32xf32>
      %104 = arith.addf %73, %103 : vector<8x32xf32>
      %c3_i32 = arith.constant 3 : i32
      %105 = arith.addi %11, %c3_i32 : i32
      %106 = arith.index_cast %105 : i32 to index
      %c0_34 = arith.constant 0 : index
      %c0_35 = arith.constant 0 : index
      %107 = vector.load %arg2[%106, %c0_34, %c0_35] : memref<32x8x128xf32, #tpu.memory_space<vmem>>, vector<1x8x128xf32>
      %108 = vector.shape_cast %107 : vector<1x8x128xf32> to vector<8x128xf32>
      %c3_i32_36 = arith.constant 3 : i32
      %109 = arith.addi %11, %c3_i32_36 : i32
      %110 = arith.index_cast %109 : i32 to index
      %c0_37 = arith.constant 0 : index
      %c0_38 = arith.constant 0 : index
      %111 = vector.load %arg3[%110, %c0_37, %c0_38] : memref<32x8x32xf32, #tpu.memory_space<vmem>>, vector<1x8x32xf32>
      %112 = vector.shape_cast %111 : vector<1x8x32xf32> to vector<8x32xf32>
      %cst_39 = arith.constant dense<0.000000e+00> : vector<8x128xf32>
      %113 = tpu.matmul %101, %3, %cst_39 {dimension_numbers = #tpu.dot_dimension_numbers<[1], [0], [0], [1], [0, 0, 1, 1], [], []>} : vector<8x32xf32>, vector<32x128xf32>, vector<8x128xf32> -> vector<8x128xf32>
      %114 = arith.addf %108, %113 : vector<8x128xf32>
      %115 = arith.negf %114 : vector<8x128xf32>
      %116 = math.exp %115 : vector<8x128xf32>
      %cst_40 = arith.constant 1.000000e+00 : f32
      %117 = vector.broadcast %cst_40 : f32 to vector<8x128xf32>
      %118 = arith.addf %117, %116 : vector<8x128xf32>
      %119 = arith.divf %117, %118 : vector<8x128xf32>
      %120 = vector.extract_strided_slice %119 {offsets = [0, 0], sizes = [8, 32], strides = [1, 1]} : vector<8x128xf32> to vector<8x32xf32>
      %121 = vector.extract_strided_slice %119 {offsets = [0, 32], sizes = [8, 32], strides = [1, 1]} : vector<8x128xf32> to vector<8x32xf32>
      %122 = vector.extract_strided_slice %119 {offsets = [0, 96], sizes = [8, 32], strides = [1, 1]} : vector<8x128xf32> to vector<8x32xf32>
      %123 = vector.extract_strided_slice %114 {offsets = [0, 64], sizes = [8, 32], strides = [1, 1]} : vector<8x128xf32> to vector<8x32xf32>
      %124 = math.tanh %123 : vector<8x32xf32>
      %125 = arith.mulf %121, %104 : vector<8x32xf32>
      %126 = arith.mulf %120, %124 : vector<8x32xf32>
      %127 = arith.addf %125, %126 : vector<8x32xf32>
      %128 = math.tanh %127 : vector<8x32xf32>
      %129 = arith.mulf %122, %128 : vector<8x32xf32>
      %130 = arith.subf %129, %101 : vector<8x32xf32>
      %131 = arith.mulf %112, %130 : vector<8x32xf32>
      %132 = arith.addf %101, %131 : vector<8x32xf32>
      %133 = arith.subf %127, %104 : vector<8x32xf32>
      %134 = arith.mulf %112, %133 : vector<8x32xf32>
      %135 = arith.addf %104, %134 : vector<8x32xf32>
      %136 = tpu.concatenate %39, %70, %101, %132 in 1 : vector<8x32xf32>, vector<8x32xf32>, vector<8x32xf32>, vector<8x32xf32> -> vector<8x128xf32>
      %137 = arith.index_cast %arg10 : i32 to index
      %c0_41 = arith.constant 0 : index
      %c0_42 = arith.constant 0 : index
      %138 = vector.load %arg7[%137, %c0_41, %c0_42] : memref<8x8x128xf32, #tpu.memory_space<vmem>>, vector<1x8x128xf32>
      %139 = vector.shape_cast %138 : vector<1x8x128xf32> to vector<8x128xf32>
      %140 = vector.shape_cast %136 : vector<8x128xf32> to vector<1x8x128xf32>
      tpu.vector_store %arg7[%137, %c0_41, %c0_42], %140 {strides = array<i32>} : memref<8x8x128xf32, #tpu.memory_space<vmem>>, vector<1x8x128xf32>,
      scf.yield %132, %135 : vector<8x32xf32>, vector<8x32xf32>
    }
    %c8_i32_7 = arith.constant 8 : i32
    %c0_8 = arith.constant 0 : index
    %c0_9 = arith.constant 0 : index
    %8 = vector.load %arg8[%c0_8, %c0_9] : memref<8x32xf32, #tpu.memory_space<vmem>>, vector<8x32xf32>
    tpu.vector_store %arg8[%c0_8, %c0_9], %7#0 {strides = array<i32>} : memref<8x32xf32, #tpu.memory_space<vmem>>, vector<8x32xf32>,
    %c0_10 = arith.constant 0 : index
    %c0_11 = arith.constant 0 : index
    %9 = vector.load %arg9[%c0_10, %c0_11] : memref<8x32xf32, #tpu.memory_space<vmem>>, vector<8x32xf32>
    tpu.vector_store %arg9[%c0_10, %c0_11], %7#1 {strides = array<i32>} : memref<8x32xf32, #tpu.memory_space<vmem>>, vector<8x32xf32>,
    return
  }
  func.func @transform_0(%arg0: i32, %arg1: i32) -> (i32, i32, i32) {
    %c0_i32 = arith.constant 0 : i32
    %c0_i32_0 = arith.constant 0 : i32
    return %arg1, %arg0, %c0_i32 : i32, i32, i32
  }
  func.func @transform_1(%arg0: i32, %arg1: i32) -> (i32, i32, i32) {
    %c0_i32 = arith.constant 0 : i32
    %c0_i32_0 = arith.constant 0 : i32
    return %arg1, %arg0, %c0_i32 : i32, i32, i32
  }
  func.func @transform_2(%arg0: i32, %arg1: i32) -> (i32, i32) {
    %c0_i32 = arith.constant 0 : i32
    %c0_i32_0 = arith.constant 0 : i32
    %c0_i32_1 = arith.constant 0 : i32
    return %c0_i32, %c0_i32_0 : i32, i32
  }
  func.func @transform_3(%arg0: i32, %arg1: i32) -> (i32, i32) {
    %c0_i32 = arith.constant 0 : i32
    %c0_i32_0 = arith.constant 0 : i32
    %c0_i32_1 = arith.constant 0 : i32
    return %c0_i32, %c0_i32_0 : i32, i32
  }
  func.func @transform_4(%arg0: i32, %arg1: i32) -> (i32, i32) {
    %c0_i32 = arith.constant 0 : i32
    %c0_i32_0 = arith.constant 0 : i32
    %c0_i32_1 = arith.constant 0 : i32
    return %c0_i32, %c0_i32_0 : i32, i32
  }
  func.func @transform_5(%arg0: i32, %arg1: i32) -> (i32, i32, i32) {
    %c0_i32 = arith.constant 0 : i32
    %c0_i32_0 = arith.constant 0 : i32
    return %arg1, %arg0, %c0_i32 : i32, i32, i32
  }
}

</mosaic_0001>

<llo_original>
// kernel: lstm_rnn_forward.1
$region0: #{lstm_rnn_forward.1}
  #allocation0 [shape = 'u32[]', space=smem, size = 0x4, offset = 0x4, fixed_abs, tag = 'smem constant byte address 0x4 - core index']
  #allocation1 [shape = 'u32[144,128]{1,0:T(1,128)}', space=vmem, size = 0x12000, scoped, tag = 'internal scratch']
  #allocation2 [shape = 'f32[8,32]{1,0:T(8,128)}', space=vmem, size = 0x1000, scoped, tag = 'scratch operand']
  #allocation3 [shape = 'f32[8,32]{1,0:T(8,128)}', space=vmem, size = 0x1000, scoped, tag = 'scratch operand']
  %s0 = inlined_call_operand.vmem [shape: f32[64,8,128], index: 0, kind: input, shape index: {}]
  %s1 = inlined_call_operand.vmem [shape: f32[64,8,32], index: 1, kind: input, shape index: {}]
  %s2 = inlined_call_operand.vmem [shape: f32[32,128], index: 2, kind: input, shape index: {}]
  %s3 = inlined_call_operand.vmem [shape: f32[1,32], index: 3, kind: input, shape index: {}]
  %s4 = inlined_call_operand.vmem [shape: f32[1,32], index: 4, kind: input, shape index: {}]
  %s5 = inlined_call_operand.vmem [shape: f32[16,8,128], index: 5, kind: output, shape index: {}]
  %s6 = sld [smem:[#allocation0]]
  $region64: #{lstm_rnn_forward.1} parent=0
    _
  %s8 = ssub.s32 1, %s6
  %s9 = scalar_select 0, %s8, %s6
  loop: start=0, step=1, limit=4
  $region2: #{lstm_rnn_forward.1} parent=0 // loop_pre_header
    _
  $region3: #{lstm_rnn_forward.1} parent=0 // loop_header
    %s11 = sphi 0, %s15
    %p12 = scmp.ge.s32.totalorder %s11, 4
    %s18 = sphi 0, %s30
    %s19 = sphi 0, %s26
    %s20 = sphi 0, %s18
    %s21 = sphi 0, %s19
    %s22 = sphi 0, %s20
    %s23 = sphi 0, %s21
    %s35 = sphi 0, %s37
    %s38 = sphi 0, %s35
    %s39 = sphi 0, %s38
    %s55 = sphi 0, %s39
    %s63 = sphi 0, %s65
    %s66 = sphi 0, %s63
    %s67 = sphi 0, %s66
    %s83 = sphi 0, %s67
    %s87 = sphi 0, %s87
    %s89 = sphi 0, %s87
    %s90 = sphi 0, %s89
    %s104 = sphi 0, %s90
    %s108 = sphi 0, %s108
    %s110 = sphi 0, %s108
    %s111 = sphi 0, %s110
    %s125 = sphi 0, %s111
    %s129 = sphi 0, %s129
    %s131 = sphi 0, %s129
    %s132 = sphi 0, %s131
    %s146 = sphi 0, %s132
    %s154 = sphi 0, %s156
    %s157 = sphi 0, %s154
    %s158 = sphi 0, %s157
    %s174 = sphi 0, %s158
  $region4: #{lstm_rnn_forward.1} parent=0 // loop_header_branch
    %14 = sbr.rel (%p12) target = $region8
  $region5: #{lstm_rnn_forward.1} parent=0 // loop_body
    %s16 = ssub.s32 %s11, 1
    %s17 = ssub.s32 %s11, 2
    %s24 = sadd.s32 1, %s19
    %p25 = scmp.ge.s32.totalorder %s24, 2
    %s26 = scalar_select %p25, 0, %s24
    %s27 = sadd.s32 1, %s18
    %s28 = scalar_select %p25, %s27, %s18
    %p29 = scmp.ge.s32.totalorder %s28, 1
    %s30 = scalar_select %p29, 0, %s28
    %s31 = ssub.s32 %s19, %s26
    %s32 = ssub.s32 %s18, %s30
    %s33 = sor.u32 %s31, %s32
    %p34 = scmp.eq.s32.totalorder %s33, 0
    %s36 = sadd.s32 %s35, 1
    %s37 = scalar_select %p34, %s35, %s36
    %p40 = pneg %p34
    %p41 = scmp.eq.s32.totalorder %s11, 1
    %p42 = por %p40, %p41
    %p43 = scmp.ne.s32.totalorder %s35, %s38
    %p44 = scmp.eq.s32.totalorder %s11, 0
    %p45 = por %p43, %p44
    %p46 = scmp.ne.s32.totalorder %s35, %s38
    %p47 = scmp.eq.s32.totalorder %s16, 1
    %p48 = por %p46, %p47
    %p49 = scmp.ne.s32.totalorder %s38, %s39
    %p50 = scmp.eq.s32.totalorder %s16, 0
    %p51 = por %p49, %p50
    %p52 = scmp.ne.s32.totalorder %s38, %s39
    %p53 = scmp.eq.s32.totalorder %s17, 1
    %p54 = por %p52, %p53
    %p56 = scmp.ne.s32.totalorder %s39, %s55
    %p57 = scmp.eq.s32.totalorder %s17, 0
    %p58 = por %p56, %p57
    %s59 = ssub.s32 %s19, %s26
    %s60 = ssub.s32 %s18, %s30
    %s61 = sor.u32 %s59, %s60
    %p62 = scmp.eq.s32.totalorder %s61, 0
    %s64 = sadd.s32 %s63, 1
    %s65 = scalar_select %p62, %s63, %s64
    %p68 = pneg %p62
    %p69 = scmp.eq.s32.totalorder %s11, 1
    %p70 = por %p68, %p69
    %p71 = scmp.ne.s32.totalorder %s63, %s66
    %p72 = scmp.eq.s32.totalorder %s11, 0
    %p73 = por %p71, %p72
    %p74 = scmp.ne.s32.totalorder %s63, %s66
    %p75 = scmp.eq.s32.totalorder %s16, 1
    %p76 = por %p74, %p75
    %p77 = scmp.ne.s32.totalorder %s66, %s67
    %p78 = scmp.eq.s32.totalorder %s16, 0
    %p79 = por %p77, %p78
    %p80 = scmp.ne.s32.totalorder %s66, %s67
    %p81 = scmp.eq.s32.totalorder %s17, 1
    %p82 = por %p80, %p81
    %p84 = scmp.ne.s32.totalorder %s67, %s83
    %p85 = scmp.eq.s32.totalorder %s17, 0
    %p86 = por %p84, %p85
    %s88 = sadd.s32 %s87, 1
    %p91 = scmp.eq.s32.totalorder %s11, 1
    %p92 = scmp.ne.s32.totalorder %s87, %s89
    %p93 = scmp.eq.s32.totalorder %s11, 0
    %p94 = por %p92, %p93
    %p95 = scmp.ne.s32.totalorder %s87, %s89
    %p96 = scmp.eq.s32.totalorder %s16, 1
    %p97 = por %p95, %p96
    %p98 = scmp.ne.s32.totalorder %s89, %s90
    %p99 = scmp.eq.s32.totalorder %s16, 0
    %p100 = por %p98, %p99
    %p101 = scmp.ne.s32.totalorder %s89, %s90
    %p102 = scmp.eq.s32.totalorder %s17, 1
    %p103 = por %p101, %p102
    %p105 = scmp.ne.s32.totalorder %s90, %s104
    %p106 = scmp.eq.s32.totalorder %s17, 0
    %p107 = por %p105, %p106
    %s109 = sadd.s32 %s108, 1
    %p112 = scmp.eq.s32.totalorder %s11, 1
    %p113 = scmp.ne.s32.totalorder %s108, %s110
    %p114 = scmp.eq.s32.totalorder %s11, 0
    %p115 = por %p113, %p114
    %p116 = scmp.ne.s32.totalorder %s108, %s110
    %p117 = scmp.eq.s32.totalorder %s16, 1
    %p118 = por %p116, %p117
    %p119 = scmp.ne.s32.totalorder %s110, %s111
    %p120 = scmp.eq.s32.totalorder %s16, 0
    %p121 = por %p119, %p120
    %p122 = scmp.ne.s32.totalorder %s110, %s111
    %p123 = scmp.eq.s32.totalorder %s17, 1
    %p124 = por %p122, %p123
    %p126 = scmp.ne.s32.totalorder %s111, %s125
    %p127 = scmp.eq.s32.totalorder %s17, 0
    %p128 = por %p126, %p127
    %s130 = sadd.s32 %s129, 1
    %p133 = scmp.eq.s32.totalorder %s11, 1
    %p134 = scmp.ne.s32.totalorder %s129, %s131
    %p135 = scmp.eq.s32.totalorder %s11, 0
    %p136 = por %p134, %p135
    %p137 = scmp.ne.s32.totalorder %s129, %s131
    %p138 = scmp.eq.s32.totalorder %s16, 1
    %p139 = por %p137, %p138
    %p140 = scmp.ne.s32.totalorder %s131, %s132
    %p141 = scmp.eq.s32.totalorder %s16, 0
    %p142 = por %p140, %p141
    %p143 = scmp.ne.s32.totalorder %s131, %s132
    %p144 = scmp.eq.s32.totalorder %s17, 1
    %p145 = por %p143, %p144
    %p147 = scmp.ne.s32.totalorder %s132, %s146
    %p148 = scmp.eq.s32.totalorder %s17, 0
    %p149 = por %p147, %p148
    %s150 = ssub.s32 %s19, %s26
    %s151 = ssub.s32 %s18, %s30
    %s152 = sor.u32 %s150, %s151
    %p153 = scmp.eq.s32.totalorder %s152, 0
    %s155 = sadd.s32 %s154, 1
    %s156 = scalar_select %p153, %s154, %s155
    %p159 = pneg %p153
    %p160 = scmp.eq.s32.totalorder %s11, 1
    %p161 = por %p159, %p160
    %p162 = scmp.ne.s32.totalorder %s154, %s157
    %p163 = scmp.eq.s32.totalorder %s11, 0
    %p164 = por %p162, %p163
    %p165 = scmp.ne.s32.totalorder %s154, %s157
    %p166 = scmp.eq.s32.totalorder %s16, 1
    %p167 = por %p165, %p166
    %p168 = scmp.ne.s32.totalorder %s157, %s158
    %p169 = scmp.eq.s32.totalorder %s16, 0
    %p170 = por %p168, %p169
    %p171 = scmp.ne.s32.totalorder %s157, %s158
    %p172 = scmp.eq.s32.totalorder %s17, 1
    %p173 = por %p171, %p172
    %p175 = scmp.ne.s32.totalorder %s158, %s174
    %p176 = scmp.eq.s32.totalorder %s17, 0
    %p177 = por %p175, %p176
    %p178 = scmp.le.s32.totalorder 1, %s11
    %p179 = scmp.lt.s32.totalorder %s11, 3
    %p180 = pnand %p178, %p179
    %p181 = pneg %p180
    // Predicated region
    $region9: #{lstm_rnn_forward.1} parent=5 // pred_check
      _
    $region10: #{lstm_rnn_forward.1} parent=5 // pred_check_branch
      %183 = sbr.rel (%p180) target = $region12
    $region11: #{lstm_rnn_forward.1} parent=5 // pred_region
      %s184 = ssub.s32 %s11, 1
      // Predicated region
      $region13: #{lstm_rnn_forward.1} parent=11 // pred_check
        %p185 = pneg %p100
      $region14: #{lstm_rnn_forward.1} parent=11 // pred_check_branch
        %187 = sbr.rel (%p185) target = $region16
      $region15: #{lstm_rnn_forward.1} parent=11 // pred_region
        _
      $region16: #{lstm_rnn_forward.1} parent=11 // pred_fallthru
        _
      // Predicated region
      $region17: #{lstm_rnn_forward.1} parent=11 // pred_check
        %p188 = pneg %p121
      $region18: #{lstm_rnn_forward.1} parent=11 // pred_check_branch
        %190 = sbr.rel (%p188) target = $region20
      $region19: #{lstm_rnn_forward.1} parent=11 // pred_region
        _
      $region20: #{lstm_rnn_forward.1} parent=11 // pred_fallthru
        _
      // Predicated region
      $region21: #{lstm_rnn_forward.1} parent=11 // pred_check
        %p191 = pneg %p142
      $region22: #{lstm_rnn_forward.1} parent=11 // pred_check_branch
        %193 = sbr.rel (%p191) target = $region24
      $region23: #{lstm_rnn_forward.1} parent=11 // pred_region
        _
      $region24: #{lstm_rnn_forward.1} parent=11 // pred_fallthru
        _
    $region12: #{lstm_rnn_forward.1} parent=5 // pred_fallthru
      _
    %p194 = scmp.lt.s32.totalorder %s11, 2
    // Predicated region
    $region25: #{lstm_rnn_forward.1} parent=5 // pred_check
      %p195 = pneg %p194
    $region26: #{lstm_rnn_forward.1} parent=5 // pred_check_branch
      %197 = sbr.rel (%p195) target = $region28
    $region27: #{lstm_rnn_forward.1} parent=5 // pred_region
      // Predicated region
      $region29: #{lstm_rnn_forward.1} parent=27 // pred_check
        %p198 = pneg %p45
      $region30: #{lstm_rnn_forward.1} parent=27 // pred_check_branch
        %200 = sbr.rel (%p198) target = $region32
      $region31: #{lstm_rnn_forward.1} parent=27 // pred_region
        %s201 = smul.u32 32, %s19
        %p202 = scmp.lt.s32.totalorder %s201, 63
        %s203 = scalar_select %p202, %s201, 63
        %p204 = scmp.lt.s32.totalorder %s18, 0
        %s205 = scalar_select %p204, %s18, 0
        %s206 = sadd.s32 %s205, %s203
        %s207 = smul.addr %s206, 8
        %s208 = scalar_lea.vmem %s0, %s207
        %s209 = smul.u32 32, %s19
      $region32: #{lstm_rnn_forward.1} parent=27 // pred_fallthru
        _
      // Predicated region
      $region33: #{lstm_rnn_forward.1} parent=27 // pred_check
        %p210 = pneg %p73
      $region34: #{lstm_rnn_forward.1} parent=27 // pred_check_branch
        %212 = sbr.rel (%p210) target = $region36
      $region35: #{lstm_rnn_forward.1} parent=27 // pred_region
        %s213 = smul.u32 32, %s19
        %p214 = scmp.lt.s32.totalorder %s213, 63
        %s215 = scalar_select %p214, %s213, 63
        %p216 = scmp.lt.s32.totalorder %s18, 0
        %s217 = scalar_select %p216, %s18, 0
        %s218 = sadd.s32 %s217, %s215
        %s219 = smul.addr %s218, 8
        %s220 = scalar_lea.vmem %s1, %s219
        %s221 = smul.u32 32, %s19
      $region36: #{lstm_rnn_forward.1} parent=27 // pred_fallthru
        _
    $region28: #{lstm_rnn_forward.1} parent=5 // pred_fallthru
      _
    %p222 = scmp.le.s32.totalorder 1, %s11
    %p223 = scmp.lt.s32.totalorder %s11, 3
    %p224 = pnand %p222, %p223
    %p225 = pneg %p224
    // Predicated region
    $region37: #{lstm_rnn_forward.1} parent=5 // pred_check
      _
    $region38: #{lstm_rnn_forward.1} parent=5 // pred_check_branch
      %227 = sbr.rel (%p224) target = $region40
    $region39: #{lstm_rnn_forward.1} parent=5 // pred_region
      %s228 = ssub.s32 %s11, 1
      %s229 = smul.u32 32, %s21
      %p230 = scmp.lt.s32.totalorder %s229, 63
      %s231 = scalar_select %p230, %s229, 63
      %p232 = scmp.lt.s32.totalorder %s20, 0
      %s233 = scalar_select %p232, %s20, 0
      %s234 = sadd.s32 %s233, %s231
      %s235 = smul.addr %s234, 8
      %s236 = scalar_lea.vmem %s0, %s235
      %p237 = pneg %p51
      %p238 = pneg %p48
      %s239 = smul.u32 32, %s21
      %p240 = scmp.lt.s32.totalorder %s239, 63
      %s241 = scalar_select %p240, %s239, 63
      %p242 = scmp.lt.s32.totalorder %s20, 0
      %s243 = scalar_select %p242, %s20, 0
      %s244 = sadd.s32 %s243, %s241
      %s245 = smul.addr %s244, 8
      %s246 = scalar_lea.vmem %s1, %s245
      %p247 = pneg %p79
      %p248 = pneg %p76
      %p249 = pneg %p100
      %p250 = pneg %p97
      %p251 = pneg %p121
      %p252 = pneg %p118
      %p253 = pneg %p142
      %p254 = pneg %p139
      %p255 = pneg %p170
      %p256 = pneg %p167
      %s257 = smul.u32 8, %s21
      %p258 = scmp.lt.s32.totalorder %s257, 15
      %s259 = scalar_select %p258, %s257, 15
      %p260 = scmp.lt.s32.totalorder %s20, 0
      %s261 = scalar_select %p260, %s20, 0
      %s262 = sadd.s32 %s261, %s259
      %s263 = smul.addr %s262, 8
      %s264 = scalar_lea.vmem %s5, %s263
      %s265 = smul.u32 32, %s21
      %p266 = scmp.lt.s32.totalorder %s265, 63
      %s267 = scalar_select %p266, %s265, 63
      %p268 = scmp.lt.s32.totalorder %s20, 0
      %s269 = scalar_select %p268, %s20, 0
      %s270 = sadd.s32 %s269, %s267
      %s271 = smul.addr %s270, 8
      %s272 = scalar_lea.vmem %s0, %s271
      %s273 = smul.u32 32, %s21
      %s274 = smul.u32 32, %s21
      %p275 = scmp.lt.s32.totalorder %s274, 63
      %s276 = scalar_select %p275, %s274, 63
      %p277 = scmp.lt.s32.totalorder %s20, 0
      %s278 = scalar_select %p277, %s20, 0
      %s279 = sadd.s32 %s278, %s276
      %s280 = smul.addr %s279, 8
      %s281 = scalar_lea.vmem %s1, %s280
      %s282 = smul.u32 32, %s21
      %s283 = smul.u32 8, %s21
      %p284 = scmp.lt.s32.totalorder %s283, 15
      %s285 = scalar_select %p284, %s283, 15
      %p286 = scmp.lt.s32.totalorder %s20, 0
      %s287 = scalar_select %p286, %s20, 0
      %s288 = sadd.s32 %s287, %s285
      %s289 = smul.addr %s288, 8
      %s290 = scalar_lea.vmem %s5, %s289
      %s291 = smul.u32 8, %s21
      %p292 = scmp.eq.s32.totalorder %s21, 0
      // Predicated region
      $region41: #{lstm_rnn_forward.1} parent=39 // pred_check
        %p293 = pneg %p292
      $region42: #{lstm_rnn_forward.1} parent=39 // pred_check_branch
        %295 = sbr.rel (%p293) target = $region44
      $region43: #{lstm_rnn_forward.1} parent=39 // pred_region
        %v296 = vld [vmem:[%s3] sm:$0x1]
        %v298 = vlaneseq
        %v299 = vshrl.u32 %v298, 7
        %v300 = vsub.s32 0, %v299
        %v301 = vrot.slane %v296, %v300
        %vm303 = vcmask 261120
        %304 = vst.msk [vmem:[#allocation2] sm:$0xff] %vm303, %v301
        %v305 = vld [vmem:[%s4] sm:$0x1]
        %v307 = vlaneseq
        %v308 = vshrl.u32 %v307, 7
        %v309 = vsub.s32 0, %v308
        %v310 = vrot.slane %v305, %v309
        %312 = vst.msk [vmem:[#allocation3] sm:$0xff] %vm303, %v310
      $region44: #{lstm_rnn_forward.1} parent=39 // pred_fallthru
        _
      %v313 = vld [vmem:[%s2] sm:$0xff]
      %v314 = vld [vmem:[%s2 + $0x8] sm:$0xff]
      %v315 = vld [vmem:[%s2 + $0x10] sm:$0xff]
      %v316 = vld [vmem:[%s2 + $0x18] sm:$0xff]
      %v317 = vld [vmem:[#allocation2] sm:$0xff]
      %v318 = vld [vmem:[#allocation3] sm:$0xff]
      loop: start=0, step=1, limit=8
      $region45: #{lstm_rnn_forward.1} parent=39 // loop_pre_header
        _
      $region46: #{lstm_rnn_forward.1} parent=39 // loop_header
        %s320 = sphi 0, %s324
        %p321 = scmp.ge.s32.totalorder %s320, 8
        %v325 = vphi %v317, %v820
        %v326 = vphi %v318, %v827
      $region47: #{lstm_rnn_forward.1} parent=39 // loop_header_branch
        %323 = sbr.rel (%p321) target = $region51
      $region48: #{lstm_rnn_forward.1} parent=39 // loop_body
        %s327 = smul.u32 %s320, 4
        %s328 = smul.u32 %s327, 8
        %s329 = scalar_lea.vmem %s272, %s328
        %v330 = vld [vmem:[%s329] sm:$0xff]
        %s331 = scalar_lea.vmem %s281, %s328
        %v332 = vld [vmem:[%s331] sm:$0xff]
        %vm333 = vcmask 261120
        %v335 = vsel %vm333, %v325, 0
        %337 = vmatprep.subr.mxu0 0.0
        %338 = vmatpush1.msra.mxu0 %v313
        %339 = vmatprep.subr.mxu0 0.0
        %340 = vmatpush1.msra.mxu0 %v314
        %341 = vmatprep.subr.mxu0 0.0
        %342 = vmatpush1.msra.mxu0 %v315
        %343 = vmatprep.subr.mxu0 0.0
        %344 = vmatpush1.msra.mxu0 %v316
        %345 = vmatprep.subr.mxu0 0.0
        %346 = vmatpush1.msra.mxu0 0.0
        %347 = vmatprep.subr.mxu0 0.0
        %348 = vmatpush1.msra.mxu0 0.0
        %349 = vmatprep.subr.mxu0 0.0
        %350 = vmatpush1.msra.mxu0 0.0
        %351 = vmatprep.subr.mxu0 0.0
        %352 = vmatpush1.msra.mxu0 0.0
        %353 = vmatprep.subr.mxu0 0.0
        %354 = vmatpush1.msra.mxu0 0.0
        %355 = vmatprep.subr.mxu0 0.0
        %356 = vmatpush1.msra.mxu0 0.0
        %357 = vmatprep.subr.mxu0 0.0
        %358 = vmatpush1.msra.mxu0 0.0
        %359 = vmatprep.subr.mxu0 0.0
        %360 = vmatpush1.msra.mxu0 0.0
        %361 = vmatprep.subr.mxu0 0.0
        %362 = vmatpush1.msra.mxu0 0.0
        %363 = vmatprep.subr.mxu0 0.0
        %364 = vmatpush1.msra.mxu0 0.0
        %365 = vmatprep.subr.mxu0 0.0
        %366 = vmatpush1.msra.mxu0 0.0
        %367 = vmatprep.subr.mxu0 0.0
        %368 = vmatpush1.msra.mxu0 0.0
        %369 = vmatprep.subr.mxu0 0.0
        %370 = vmatpush1.msra.mxu0 0.0
        %371 = vmatprep.subr.mxu0 0.0
        %372 = vmatpush1.msra.mxu0 0.0
        %373 = vmatprep.subr.mxu0 0.0
        %374 = vmatpush1.msra.mxu0 0.0
        %375 = vmatprep.subr.mxu0 0.0
        %376 = vmatpush1.msra.mxu0 0.0
        %377 = vmatprep.subr.mxu0 0.0
        %378 = vmatpush1.msra.mxu0 0.0
        %379 = vmatprep.subr.mxu0 0.0
        %380 = vmatpush1.msra.mxu0 0.0
        %381 = vmatprep.subr.mxu0 0.0
        %382 = vmatpush1.msra.mxu0 0.0
        %383 = vmatprep.subr.mxu0 0.0
        %384 = vmatpush1.msra.mxu0 0.0
        %385 = vmatprep.subr.mxu0 0.0
        %386 = vmatpush1.msra.mxu0 0.0
        %387 = vmatprep.subr.mxu0 0.0
        %388 = vmatpush1.msra.mxu0 0.0
        %389 = vmatprep.subr.mxu0 0.0
        %390 = vmatpush1.msra.mxu0 0.0
        %391 = vmatprep.subr.mxu0 0.0
        %392 = vmatpush1.msra.mxu0 0.0
        %393 = vmatprep.subr.mxu0 0.0
        %394 = vmatpush1.msra.mxu0 0.0
        %395 = vmatprep.subr.mxu0 0.0
        %396 = vmatpush1.msra.mxu0 0.0
        %397 = vmatprep.subr.mxu0 0.0
        %398 = vmatpush1.msra.mxu0 0.0
        %399 = vmatprep.subr.mxu0 0.0
        %400 = vmatpush1.msra.mxu0 0.0
        %401 = vmatprep.mubr.f32.mxu0 0.0
        %402 = vmatmul.mubr.f32.gmra.mrb[0].mxu0 %v335
        %v403 = vpop.f32.mrb[0].mxu0
        %v404 = vadd.f32 0.0, %v403
        %v405 = vpop.f32.mrb[0].mxu0
        %406 = vdwg.mxu0
        %v407 = vadd.f32 %v330, %v404
        %v408 = vxor.u32 %v407, 2147483648
        %v409 = vmul.f32 %v408, 1.442695
        %v410 = vpow.pop %v409
        %v411 = vadd.f32 %v410, 1.0
        %v412 = vrcp.pop %v411
        %v413 = vmul.f32 1.0, %v412
        %v414 = vtanh.pop %v407
        %416 = vrot.lane.b32.xlu0 %v326, 32
        %v417 = vpop.permute.xlu0 %416
        %v419 = vmul.f32 %v413, %v417
        %421 = vrot.lane.b32.xlu0 %v414, 64
        %v422 = vpop.permute.xlu0 %421
        %v424 = vmul.f32 %v413, %v422
        %426 = vrot.lane.b32.xlu0 %v424, 32
        %v427 = vpop.permute.xlu0 %426
        %v429 = vadd.f32 %v419, %v427
        %v430 = vtanh.pop %v429
        %432 = vrot.lane.b32.xlu0 %v430, 64
        %v433 = vpop.permute.xlu0 %432
        %v435 = vmul.f32 %v413, %v433
        %436 = vrot.lane.b32.xlu0 %v325, 96
        %v437 = vpop.permute.xlu0 %436
        %v439 = vsub.f32 %v435, %v437
        %441 = vrot.lane.b32.xlu0 %v439, 32
        %v442 = vpop.permute.xlu0 %441
        %v444 = vmul.f32 %v332, %v442
        %v445 = vadd.f32 %v325, %v444
        %v446 = vsub.f32 %v429, %v417
        %448 = vrot.lane.b32.xlu0 %v446, 96
        %v449 = vpop.permute.xlu0 %448
        %v451 = vmul.f32 %v332, %v449
        %v452 = vadd.f32 %v326, %v451
        %s453 = sadd.s32 %s327, 1
        %s454 = smul.u32 %s453, 8
        %s455 = scalar_lea.vmem %s272, %s454
        %v456 = vld [vmem:[%s455] sm:$0xff]
        %s457 = scalar_lea.vmem %s281, %s454
        %v458 = vld [vmem:[%s457] sm:$0xff]
        %v460 = vsel %vm333, %v445, 0
        %462 = vmatprep.subr.mxu0 0.0
        %463 = vmatpush1.msra.mxu0 %v313
        %464 = vmatprep.subr.mxu0 0.0
        %465 = vmatpush1.msra.mxu0 %v314
        %466 = vmatprep.subr.mxu0 0.0
        %467 = vmatpush1.msra.mxu0 %v315
        %468 = vmatprep.subr.mxu0 0.0
        %469 = vmatpush1.msra.mxu0 %v316
        %470 = vmatprep.subr.mxu0 0.0
        %471 = vmatpush1.msra.mxu0 0.0
        %472 = vmatprep.subr.mxu0 0.0
        %473 = vmatpush1.msra.mxu0 0.0
        %474 = vmatprep.subr.mxu0 0.0
        %475 = vmatpush1.msra.mxu0 0.0
        %476 = vmatprep.subr.mxu0 0.0
        %477 = vmatpush1.msra.mxu0 0.0
        %478 = vmatprep.subr.mxu0 0.0
        %479 = vmatpush1.msra.mxu0 0.0
        %480 = vmatprep.subr.mxu0 0.0
        %481 = vmatpush1.msra.mxu0 0.0
        %482 = vmatprep.subr.mxu0 0.0
        %483 = vmatpush1.msra.mxu0 0.0
        %484 = vmatprep.subr.mxu0 0.0
        %485 = vmatpush1.msra.mxu0 0.0
        %486 = vmatprep.subr.mxu0 0.0
        %487 = vmatpush1.msra.mxu0 0.0
        %488 = vmatprep.subr.mxu0 0.0
        %489 = vmatpush1.msra.mxu0 0.0
        %490 = vmatprep.subr.mxu0 0.0
        %491 = vmatpush1.msra.mxu0 0.0
        %492 = vmatprep.subr.mxu0 0.0
        %493 = vmatpush1.msra.mxu0 0.0
        %494 = vmatprep.subr.mxu0 0.0
        %495 = vmatpush1.msra.mxu0 0.0
        %496 = vmatprep.subr.mxu0 0.0
        %497 = vmatpush1.msra.mxu0 0.0
        %498 = vmatprep.subr.mxu0 0.0
        %499 = vmatpush1.msra.mxu0 0.0
        %500 = vmatprep.subr.mxu0 0.0
        %501 = vmatpush1.msra.mxu0 0.0
        %502 = vmatprep.subr.mxu0 0.0
        %503 = vmatpush1.msra.mxu0 0.0
        %504 = vmatprep.subr.mxu0 0.0
        %505 = vmatpush1.msra.mxu0 0.0
        %506 = vmatprep.subr.mxu0 0.0
        %507 = vmatpush1.msra.mxu0 0.0
        %508 = vmatprep.subr.mxu0 0.0
        %509 = vmatpush1.msra.mxu0 0.0
        %510 = vmatprep.subr.mxu0 0.0
        %511 = vmatpush1.msra.mxu0 0.0
        %512 = vmatprep.subr.mxu0 0.0
        %513 = vmatpush1.msra.mxu0 0.0
        %514 = vmatprep.subr.mxu0 0.0
        %515 = vmatpush1.msra.mxu0 0.0
        %516 = vmatprep.subr.mxu0 0.0
        %517 = vmatpush1.msra.mxu0 0.0
        %518 = vmatprep.subr.mxu0 0.0
        %519 = vmatpush1.msra.mxu0 0.0
        %520 = vmatprep.subr.mxu0 0.0
        %521 = vmatpush1.msra.mxu0 0.0
        %522 = vmatprep.subr.mxu0 0.0
        %523 = vmatpush1.msra.mxu0 0.0
        %524 = vmatprep.subr.mxu0 0.0
        %525 = vmatpush1.msra.mxu0 0.0
        %526 = vmatprep.mubr.f32.mxu0 0.0
        %527 = vmatmul.mubr.f32.gmra.mrb[0].mxu0 %v460
        %v528 = vpop.f32.mrb[0].mxu0
        %v529 = vadd.f32 0.0, %v528
        %v530 = vpop.f32.mrb[0].mxu0
        %531 = vdwg.mxu0
        %v532 = vadd.f32 %v456, %v529
        %v533 = vxor.u32 %v532, 2147483648
        %v534 = vmul.f32 %v533, 1.442695
        %v535 = vpow.pop %v534
        %v536 = vadd.f32 %v535, 1.0
        %v537 = vrcp.pop %v536
        %v538 = vmul.f32 1.0, %v537
        %v539 = vtanh.pop %v532
        %541 = vrot.lane.b32.xlu0 %v452, 32
        %v542 = vpop.permute.xlu0 %541
        %v544 = vmul.f32 %v538, %v542
        %546 = vrot.lane.b32.xlu0 %v539, 64
        %v547 = vpop.permute.xlu0 %546
        %v549 = vmul.f32 %v538, %v547
        %551 = vrot.lane.b32.xlu0 %v549, 32
        %v552 = vpop.permute.xlu0 %551
        %v554 = vadd.f32 %v544, %v552
        %v555 = vtanh.pop %v554
        %557 = vrot.lane.b32.xlu0 %v555, 64
        %v558 = vpop.permute.xlu0 %557
        %v560 = vmul.f32 %v538, %v558
        %561 = vrot.lane.b32.xlu0 %v445, 96
        %v562 = vpop.permute.xlu0 %561
        %v564 = vsub.f32 %v560, %v562
        %566 = vrot.lane.b32.xlu0 %v564, 32
        %v567 = vpop.permute.xlu0 %566
        %v569 = vmul.f32 %v458, %v567
        %v570 = vadd.f32 %v445, %v569
        %v571 = vsub.f32 %v554, %v542
        %573 = vrot.lane.b32.xlu0 %v571, 96
        %v574 = vpop.permute.xlu0 %573
        %v576 = vmul.f32 %v458, %v574
        %v577 = vadd.f32 %v452, %v576
        %s578 = sadd.s32 %s327, 2
        %s579 = smul.u32 %s578, 8
        %s580 = scalar_lea.vmem %s272, %s579
        %v581 = vld [vmem:[%s580] sm:$0xff]
        %s582 = scalar_lea.vmem %s281, %s579
        %v583 = vld [vmem:[%s582] sm:$0xff]
        %v585 = vsel %vm333, %v570, 0
        %587 = vmatprep.subr.mxu0 0.0
        %588 = vmatpush1.msra.mxu0 %v313
        %589 = vmatprep.subr.mxu0 0.0
        %590 = vmatpush1.msra.mxu0 %v314
        %591 = vmatprep.subr.mxu0 0.0
        %592 = vmatpush1.msra.mxu0 %v315
        %593 = vmatprep.subr.mxu0 0.0
        %594 = vmatpush1.msra.mxu0 %v316
        %595 = vmatprep.subr.mxu0 0.0
        %596 = vmatpush1.msra.mxu0 0.0
        %597 = vmatprep.subr.mxu0 0.0
        %598 = vmatpush1.msra.mxu0 0.0
        %599 = vmatprep.subr.mxu0 0.0
        %600 = vmatpush1.msra.mxu0 0.0
        %601 = vmatprep.subr.mxu0 0.0
        %602 = vmatpush1.msra.mxu0 0.0
        %603 = vmatprep.subr.mxu0 0.0
        %604 = vmatpush1.msra.mxu0 0.0
        %605 = vmatprep.subr.mxu0 0.0
        %606 = vmatpush1.msra.mxu0 0.0
        %607 = vmatprep.subr.mxu0 0.0
        %608 = vmatpush1.msra.mxu0 0.0
        %609 = vmatprep.subr.mxu0 0.0
        %610 = vmatpush1.msra.mxu0 0.0
        %611 = vmatprep.subr.mxu0 0.0
        %612 = vmatpush1.msra.mxu0 0.0
        %613 = vmatprep.subr.mxu0 0.0
        %614 = vmatpush1.msra.mxu0 0.0
        %615 = vmatprep.subr.mxu0 0.0
        %616 = vmatpush1.msra.mxu0 0.0
        %617 = vmatprep.subr.mxu0 0.0
        %618 = vmatpush1.msra.mxu0 0.0
        %619 = vmatprep.subr.mxu0 0.0
        %620 = vmatpush1.msra.mxu0 0.0
        %621 = vmatprep.subr.mxu0 0.0
        %622 = vmatpush1.msra.mxu0 0.0
        %623 = vmatprep.subr.mxu0 0.0
        %624 = vmatpush1.msra.mxu0 0.0
        %625 = vmatprep.subr.mxu0 0.0
        %626 = vmatpush1.msra.mxu0 0.0
        %627 = vmatprep.subr.mxu0 0.0
        %628 = vmatpush1.msra.mxu0 0.0
        %629 = vmatprep.subr.mxu0 0.0
        %630 = vmatpush1.msra.mxu0 0.0
        %631 = vmatprep.subr.mxu0 0.0
        %632 = vmatpush1.msra.mxu0 0.0
        %633 = vmatprep.subr.mxu0 0.0
        %634 = vmatpush1.msra.mxu0 0.0
        %635 = vmatprep.subr.mxu0 0.0
        %636 = vmatpush1.msra.mxu0 0.0
        %637 = vmatprep.subr.mxu0 0.0
        %638 = vmatpush1.msra.mxu0 0.0
        %639 = vmatprep.subr.mxu0 0.0
        %640 = vmatpush1.msra.mxu0 0.0
        %641 = vmatprep.subr.mxu0 0.0
        %642 = vmatpush1.msra.mxu0 0.0
        %643 = vmatprep.subr.mxu0 0.0
        %644 = vmatpush1.msra.mxu0 0.0
        %645 = vmatprep.subr.mxu0 0.0
        %646 = vmatpush1.msra.mxu0 0.0
        %647 = vmatprep.subr.mxu0 0.0
        %648 = vmatpush1.msra.mxu0 0.0
        %649 = vmatprep.subr.mxu0 0.0
        %650 = vmatpush1.msra.mxu0 0.0
        %651 = vmatprep.mubr.f32.mxu0 0.0
        %652 = vmatmul.mubr.f32.gmra.mrb[0].mxu0 %v585
        %v653 = vpop.f32.mrb[0].mxu0
        %v654 = vadd.f32 0.0, %v653
        %v655 = vpop.f32.mrb[0].mxu0
        %656 = vdwg.mxu0
        %v657 = vadd.f32 %v581, %v654
        %v658 = vxor.u32 %v657, 2147483648
        %v659 = vmul.f32 %v658, 1.442695
        %v660 = vpow.pop %v659
        %v661 = vadd.f32 %v660, 1.0
        %v662 = vrcp.pop %v661
        %v663 = vmul.f32 1.0, %v662
        %v664 = vtanh.pop %v657
        %666 = vrot.lane.b32.xlu0 %v577, 32
        %v667 = vpop.permute.xlu0 %666
        %v669 = vmul.f32 %v663, %v667
        %671 = vrot.lane.b32.xlu0 %v664, 64
        %v672 = vpop.permute.xlu0 %671
        %v674 = vmul.f32 %v663, %v672
        %676 = vrot.lane.b32.xlu0 %v674, 32
        %v677 = vpop.permute.xlu0 %676
        %v679 = vadd.f32 %v669, %v677
        %v680 = vtanh.pop %v679
        %682 = vrot.lane.b32.xlu0 %v680, 64
        %v683 = vpop.permute.xlu0 %682
        %v685 = vmul.f32 %v663, %v683
        %686 = vrot.lane.b32.xlu0 %v570, 96
        %v687 = vpop.permute.xlu0 %686
        %v689 = vsub.f32 %v685, %v687
        %691 = vrot.lane.b32.xlu0 %v689, 32
        %v692 = vpop.permute.xlu0 %691
        %v694 = vmul.f32 %v583, %v692
        %v695 = vadd.f32 %v570, %v694
        %v696 = vsub.f32 %v679, %v667
        %698 = vrot.lane.b32.xlu0 %v696, 96
        %v699 = vpop.permute.xlu0 %698
        %v701 = vmul.f32 %v583, %v699
        %v702 = vadd.f32 %v577, %v701
        %s703 = sadd.s32 %s327, 3
        %s704 = smul.u32 %s703, 8
        %s705 = scalar_lea.vmem %s272, %s704
        %v706 = vld [vmem:[%s705] sm:$0xff]
        %s707 = scalar_lea.vmem %s281, %s704
        %v708 = vld [vmem:[%s707] sm:$0xff]
        %v710 = vsel %vm333, %v695, 0
        %712 = vmatprep.subr.mxu0 0.0
        %713 = vmatpush1.msra.mxu0 %v313
        %714 = vmatprep.subr.mxu0 0.0
        %715 = vmatpush1.msra.mxu0 %v314
        %716 = vmatprep.subr.mxu0 0.0
        %717 = vmatpush1.msra.mxu0 %v315
        %718 = vmatprep.subr.mxu0 0.0
        %719 = vmatpush1.msra.mxu0 %v316
        %720 = vmatprep.subr.mxu0 0.0
        %721 = vmatpush1.msra.mxu0 0.0
        %722 = vmatprep.subr.mxu0 0.0
        %723 = vmatpush1.msra.mxu0 0.0
        %724 = vmatprep.subr.mxu0 0.0
        %725 = vmatpush1.msra.mxu0 0.0
        %726 = vmatprep.subr.mxu0 0.0
        %727 = vmatpush1.msra.mxu0 0.0
        %728 = vmatprep.subr.mxu0 0.0
        %729 = vmatpush1.msra.mxu0 0.0
        %730 = vmatprep.subr.mxu0 0.0
        %731 = vmatpush1.msra.mxu0 0.0
        %732 = vmatprep.subr.mxu0 0.0
        %733 = vmatpush1.msra.mxu0 0.0
        %734 = vmatprep.subr.mxu0 0.0
        %735 = vmatpush1.msra.mxu0 0.0
        %736 = vmatprep.subr.mxu0 0.0
        %737 = vmatpush1.msra.mxu0 0.0
        %738 = vmatprep.subr.mxu0 0.0
        %739 = vmatpush1.msra.mxu0 0.0
        %740 = vmatprep.subr.mxu0 0.0
        %741 = vmatpush1.msra.mxu0 0.0
        %742 = vmatprep.subr.mxu0 0.0
        %743 = vmatpush1.msra.mxu0 0.0
        %744 = vmatprep.subr.mxu0 0.0
        %745 = vmatpush1.msra.mxu0 0.0
        %746 = vmatprep.subr.mxu0 0.0
        %747 = vmatpush1.msra.mxu0 0.0
        %748 = vmatprep.subr.mxu0 0.0
        %749 = vmatpush1.msra.mxu0 0.0
        %750 = vmatprep.subr.mxu0 0.0
        %751 = vmatpush1.msra.mxu0 0.0
        %752 = vmatprep.subr.mxu0 0.0
        %753 = vmatpush1.msra.mxu0 0.0
        %754 = vmatprep.subr.mxu0 0.0
        %755 = vmatpush1.msra.mxu0 0.0
        %756 = vmatprep.subr.mxu0 0.0
        %757 = vmatpush1.msra.mxu0 0.0
        %758 = vmatprep.subr.mxu0 0.0
        %759 = vmatpush1.msra.mxu0 0.0
        %760 = vmatprep.subr.mxu0 0.0
        %761 = vmatpush1.msra.mxu0 0.0
        %762 = vmatprep.subr.mxu0 0.0
        %763 = vmatpush1.msra.mxu0 0.0
        %764 = vmatprep.subr.mxu0 0.0
        %765 = vmatpush1.msra.mxu0 0.0
        %766 = vmatprep.subr.mxu0 0.0
        %767 = vmatpush1.msra.mxu0 0.0
        %768 = vmatprep.subr.mxu0 0.0
        %769 = vmatpush1.msra.mxu0 0.0
        %770 = vmatprep.subr.mxu0 0.0
        %771 = vmatpush1.msra.mxu0 0.0
        %772 = vmatprep.subr.mxu0 0.0
        %773 = vmatpush1.msra.mxu0 0.0
        %774 = vmatprep.subr.mxu0 0.0
        %775 = vmatpush1.msra.mxu0 0.0
        %776 = vmatprep.mubr.f32.mxu0 0.0
        %777 = vmatmul.mubr.f32.gmra.mrb[0].mxu0 %v710
        %v778 = vpop.f32.mrb[0].mxu0
        %v779 = vadd.f32 0.0, %v778
        %v780 = vpop.f32.mrb[0].mxu0
        %781 = vdwg.mxu0
        %v782 = vadd.f32 %v706, %v779
        %v783 = vxor.u32 %v782, 2147483648
        %v784 = vmul.f32 %v783, 1.442695
        %v785 = vpow.pop %v784
        %v786 = vadd.f32 %v785, 1.0
        %v787 = vrcp.pop %v786
        %v788 = vmul.f32 1.0, %v787
        %v789 = vtanh.pop %v782
        %791 = vrot.lane.b32.xlu0 %v702, 32
        %v792 = vpop.permute.xlu0 %791
        %v794 = vmul.f32 %v788, %v792
        %796 = vrot.lane.b32.xlu0 %v789, 64
        %v797 = vpop.permute.xlu0 %796
        %v799 = vmul.f32 %v788, %v797
        %801 = vrot.lane.b32.xlu0 %v799, 32
        %v802 = vpop.permute.xlu0 %801
        %v804 = vadd.f32 %v794, %v802
        %v805 = vtanh.pop %v804
        %807 = vrot.lane.b32.xlu0 %v805, 64
        %v808 = vpop.permute.xlu0 %807
        %v810 = vmul.f32 %v788, %v808
        %811 = vrot.lane.b32.xlu0 %v695, 96
        %v812 = vpop.permute.xlu0 %811
        %v814 = vsub.f32 %v810, %v812
        %816 = vrot.lane.b32.xlu0 %v814, 32
        %v817 = vpop.permute.xlu0 %816
        %v819 = vmul.f32 %v708, %v817
        %v820 = vadd.f32 %v695, %v819
        %v821 = vsub.f32 %v804, %v792
        %823 = vrot.lane.b32.xlu0 %v821, 96
        %v824 = vpop.permute.xlu0 %823
        %v826 = vmul.f32 %v708, %v824
        %v827 = vadd.f32 %v702, %v826
        %828 = vrot.lane.b32.xlu0 %v570, 32
        %v829 = vpop.permute.xlu0 %828
        %831 = vrot.lane.b32.xlu0 %v695, 64
        %v832 = vpop.permute.xlu0 %831
        %835 = vrot.lane.b32.xlu0 %v820, 96
        %v836 = vpop.permute.xlu0 %835
        %v838 = vsel %vm333, %v445, %v829
        %vm839 = vcmask 523264
        %v840 = vsel %vm839, %v838, %v832
        %vm841 = vcmask 785408
        %v842 = vsel %vm841, %v840, %v836
        %s843 = smul.u32 %s320, 8
        %s844 = scalar_lea.vmem %s290, %s843
        %845 = vst [vmem:[%s844] sm:$0xff] %v842
      $region49: #{lstm_rnn_forward.1} parent=39 // loop_footer
        %s324 = sadd.s32 1, %s320
      $region50: #{lstm_rnn_forward.1} parent=39 // loop_footer_branch
        %319 = sbr.rel target = $region46
      $region51: #{lstm_rnn_forward.1} parent=39 // loop_exit
        _
      %vm846 = vcmask 261120
      %847 = vst.msk [vmem:[#allocation2] sm:$0xff] %vm846, %v325
      %848 = vst.msk [vmem:[#allocation3] sm:$0xff] %vm846, %v326
      %s849 = smul.u32 8, %s21
      %p850 = scmp.lt.s32.totalorder %s849, 15
      %s851 = scalar_select %p850, %s849, 15
      %p852 = scmp.lt.s32.totalorder %s20, 0
      %s853 = scalar_select %p852, %s20, 0
      %s854 = sadd.s32 %s853, %s851
      %s855 = smul.addr %s854, 8
      %s856 = scalar_lea.vmem %s5, %s855
      // Predicated region
      $region52: #{lstm_rnn_forward.1} parent=39 // pred_check
        %p857 = pneg %p167
      $region53: #{lstm_rnn_forward.1} parent=39 // pred_check_branch
        %859 = sbr.rel (%p857) target = $region55
      $region54: #{lstm_rnn_forward.1} parent=39 // pred_region
        %s860 = smul.u32 8, %s21
      $region55: #{lstm_rnn_forward.1} parent=39 // pred_fallthru
        _
    $region40: #{lstm_rnn_forward.1} parent=5 // pred_fallthru
      _
    %p861 = scmp.le.s32.totalorder 2, %s11
    // Predicated region
    $region56: #{lstm_rnn_forward.1} parent=5 // pred_check
      %p862 = pneg %p861
    $region57: #{lstm_rnn_forward.1} parent=5 // pred_check_branch
      %864 = sbr.rel (%p862) target = $region59
    $region58: #{lstm_rnn_forward.1} parent=5 // pred_region
      %s865 = ssub.s32 %s11, 2
      // Predicated region
      $region60: #{lstm_rnn_forward.1} parent=58 // pred_check
        %p866 = pneg %p173
      $region61: #{lstm_rnn_forward.1} parent=58 // pred_check_branch
        %868 = sbr.rel (%p866) target = $region63
      $region62: #{lstm_rnn_forward.1} parent=58 // pred_region
        %s869 = smul.u32 8, %s23
        %p870 = scmp.lt.s32.totalorder %s869, 15
        %s871 = scalar_select %p870, %s869, 15
        %p872 = scmp.lt.s32.totalorder %s22, 0
        %s873 = scalar_select %p872, %s22, 0
        %s874 = sadd.s32 %s873, %s871
        %s875 = smul.addr %s874, 8
        %s876 = scalar_lea.vmem %s5, %s875
      $region63: #{lstm_rnn_forward.1} parent=58 // pred_fallthru
        _
    $region59: #{lstm_rnn_forward.1} parent=5 // pred_fallthru
      _
  $region6: #{lstm_rnn_forward.1} parent=0 // loop_footer
    %s15 = sadd.s32 1, %s11
  $region7: #{lstm_rnn_forward.1} parent=0 // loop_footer_branch
    %10 = sbr.rel target = $region3
  $region8: #{lstm_rnn_forward.1} parent=0 // loop_exit
    _

</llo_original>
